<compile_context>
chip_gen: v7x
topology: tpu7x:2x2x1
jax: 0.10.0
libtpu: 0.0.40
codegen_flags: <defaults>
</compile_context>

<pallas_src>
import math

import jax
import jax.numpy as jnp
from jax.experimental import pallas as pl
from jax.experimental.pallas import tpu as pltpu


# ----------------------------- Pallas kernel --------------------------------
def make_pinn_kernel(d_in, chunk, n_chunks, use_bf16):
    compute_dt = jnp.bfloat16 if use_bf16 else jnp.float32
    hp = jax.lax.Precision.HIGHEST

    def pinn_kernel(x_ref, w0_ref, b0_ref, w1_ref, b1_ref, w2_ref, b2_ref,
                    real_ref, imag_ref):
        # Tiny weights: resident in VMEM for every grid step (constant index maps).
        w0 = w0_ref[...]                        # (H0, D_in)  norm folded in
        b0 = b0_ref[...]                        # (H0, 1)
        w1 = w1_ref[...].astype(compute_dt)     # (H1, H0)
        b1 = b1_ref[...]                        # (H1, 1)
        w2 = w2_ref[...].astype(compute_dt)     # (2, H1)
        b2 = b2_ref[...]                        # (2, 1)

        def process(off):
            x = x_ref[:, pl.ds(off, chunk)]     # (D_in, chunk), batch on lanes
            # layer 0: K == D_in is tiny -> VPU broadcast FMAs (skip the MXU)
            h = w0[:, 0:1] * x[0:1, :]
            for k in range(1, d_in):            # unrolled at trace time
                h = h + w0[:, k:k + 1] * x[k:k + 1, :]
            h = jnp.tanh((h + b0).astype(compute_dt))            # EUP
            # layer 1: only non-trivial matmul -> MXU, f32 accumulation
            h = jnp.dot(w1, h, preferred_element_type=jnp.float32,
                        precision=hp) + b1
            h = jnp.tanh(h.astype(compute_dt))                   # EUP
            # layer 2: (2, H1) @ (H1, chunk) -> (2, chunk)
            psi = jnp.dot(w2, h, preferred_element_type=jnp.float32,
                          precision=hp) + b2
            real_ref[:, pl.ds(off, chunk)] = psi[0:1, :].astype(real_ref.dtype)
            imag_ref[:, pl.ds(off, chunk)] = psi[1:2, :].astype(imag_ref.dtype)

        if n_chunks == 1:
            process(0)
        else:
            # Strip-mine the lane axis so live (32, chunk) activations stay
            # well under the vreg budget even at large batch tiles.
            def body(c, carry):
                process(pl.multiple_of(c * chunk, chunk))
                return carry
            jax.lax.fori_loop(0, n_chunks, body, 0, unroll=True)

    return pinn_kernel


def _round_up(v, m):
    return ((v + m - 1) // m) * m


# ------------------------------ wrapper --------------------------------------
def schrodinger_pinn_forward(params, lower, upper, _time, *coordinates,
                             batch_tile=4096, use_bf16=False):
    """Mirrors SchrodingerPINN.forward: returns (real, imaginary), each (N, 1)."""
    feats = [_time, *coordinates]
    (w0, b0), (w1, b1), (w2, b2) = params          # PyTorch layout: W is (out, in)
    H0, H1, D_out = w0.shape[0], w1.shape[0], w2.shape[0]
    D_in = w0.shape[1]
    assert D_out == 2 and D_in == len(feats)

    N = feats[0].shape[0]

    # Feature-major input built directly: (N,1) -> (1,N) reshape is free,
    # no (N,2) concat + transpose + zero-buffer scatter in the wrapper.
    x_t = jnp.concatenate(
        [jnp.reshape(f.astype(jnp.float32), (1, -1)) for f in feats], axis=0)  # (D_in, N)

    # Fold (x - lower) / (upper - lower) into layer 0 (constant-folded by XLA).
    lower = jnp.asarray(lower, jnp.float32)
    upper = jnp.asarray(upper, jnp.float32)
    scale = 1.0 / (upper - lower)                                 # (D_in,)
    w0f = w0.astype(jnp.float32) * scale[None, :]                 # (H0, D_in)
    b0f = b0.astype(jnp.float32) - w0.astype(jnp.float32) @ (lower * scale)

    # Lane tile: large (amortizes ~0.35us/grid-step overhead), multiple of 128.
    # When a single tile would cover the whole batch, split into two (>=512
    # lanes each) so the "parallel" grid axis shards across both v7x TCs.
    bt = max(128, (int(batch_tile) // 128) * 128)
    n_r = _round_up(N, 128)
    T = min(bt, n_r)
    if T == n_r:
        half = _round_up(-(-N // 2), 128)
        if half >= 512:
            T = half
    n_tiles = -(-N // T)
    N_pad = n_tiles * T

    if N_pad != N:
        x_t = jnp.pad(x_t, ((0, 0), (0, N_pad - N)))

    # In-kernel strip-mining of the lane axis (keeps vreg pressure bounded).
    if T > 512:
        chunk = 512 if T % 512 == 0 else (256 if T % 256 == 0 else 128)
    else:
        chunk = T
    n_chunks = T // chunk

    b0c = b0f.reshape(H0, 1)
    b1c = b1.astype(jnp.float32).reshape(H1, 1)
    b2c = b2.astype(jnp.float32).reshape(D_out, 1)

    def whole(shape):
        return pl.BlockSpec(shape, lambda i: tuple(0 for _ in shape))

    weight_bytes = 4 * (H0 * D_in + H0 + H1 * H0 + H1 + D_out * H1 + D_out)
    cost = pl.CostEstimate(
        flops=2 * (H0 * D_in + H1 * H0 + D_out * H1) * N_pad,
        transcendentals=(H0 + H1) * N_pad,              # the actual bottleneck
        bytes_accessed=(D_in + D_out) * 4 * N_pad + weight_bytes,
    )

    kernel = make_pinn_kernel(D_in, chunk, n_chunks, use_bf16)

    real_row, imag_row = pl.pallas_call(
        kernel,
        out_shape=(jax.ShapeDtypeStruct((1, N_pad), jnp.float32),
                   jax.ShapeDtypeStruct((1, N_pad), jnp.float32)),
        grid_spec=pltpu.PrefetchScalarGridSpec(
            num_scalar_prefetch=0,
            grid=(n_tiles,),
            in_specs=[
                pl.BlockSpec((D_in, T), lambda i: (0, i)),     # x (batch on lanes)
                whole((H0, D_in)), whole((H0, 1)),             # layer 0 (norm folded)
                whole((H1, H0)), whole((H1, 1)),               # layer 1
                whole((D_out, H1)), whole((D_out, 1)),         # layer 2
            ],
            out_specs=[pl.BlockSpec((1, T), lambda i: (0, i)),  # real row
                       pl.BlockSpec((1, T), lambda i: (0, i))],  # imag row
        ),
        compiler_params=pltpu.CompilerParams(
            dimension_semantics=("parallel",)),                 # megacore sharding
        cost_estimate=cost,
    )(x_t, w0f, b0c, w1.astype(jnp.float32), b1c, w2.astype(jnp.float32), b2c)

    real = real_row[0, :N].reshape(N, 1)
    imaginary = imag_row[0, :N].reshape(N, 1)
    return real, imaginary


# ------------------------- deterministic init --------------------------------
def xavier_uniform(key, fan_in, fan_out, dtype=jnp.float32):
    bound = math.sqrt(6.0 / (fan_in + fan_out))
    # PyTorch nn.Linear layout: (out_features, in_features)
    return jax.random.uniform(key, (fan_out, fan_in), dtype,
                              minval=-bound, maxval=bound)


def init_params(key, layers):
    params = []
    for i in range(len(layers) - 1):
        key, sub = jax.random.split(key)
        w = xavier_uniform(sub, layers[i], layers[i + 1])
        b = jnp.zeros((layers[i + 1],), jnp.float32)   # zeros_(bias)
        params.append((w, b))
    return params


# ------------------------------ reference ------------------------------------
def reference_forward(params, lower, upper, _time, *coordinates):
    hp = jax.lax.Precision.HIGHEST
    x = jnp.concatenate([_time, *coordinates], axis=1)
    h = (x - lower[None, :]) / (upper[None, :] - lower[None, :])
    (w0, b0), (w1, b1), (w2, b2) = params
    h = jnp.tanh(jnp.dot(h, w0.T, precision=hp) + b0)
    h = jnp.tanh(jnp.dot(h, w1.T, precision=hp) + b1)
    psi = jnp.dot(h, w2.T, precision=hp) + b2
    return psi[:, 0:1], psi[:, 1:2]


# --------------------------------- main ---------------------------------------
if __name__ == "__main__":
    # layers = [in_features, hidden, hidden, 2]; in_features = 1 (time) + 1 (x)
    layers = [2, 32, 32, 2]

    key = jax.random.PRNGKey(0)
    kp, kt, kx, kt2, kx2 = jax.random.split(key, 5)

    params = init_params(kp, layers)
    lower = jnp.array([0.0, -5.0], jnp.float32)   # shape (in_features,)
    upper = jnp.array([1.0, 5.0], jnp.float32)

    # Small batch (not a multiple of 128) -> exercises lane padding.
    batch = 16
    _time = jax.random.uniform(kt, (batch, 1), jnp.float32, 0.0, 1.0)
    coord = jax.random.uniform(kx, (batch, 1), jnp.float32, -5.0, 5.0)

    real, imag = schrodinger_pinn_forward(params, lower, upper, _time, coord)
    jax.block_until_ready((real, imag))

    real_ref, imag_ref = reference_forward(params, lower, upper, _time, coord)
    assert real.shape == (batch, 1) and imag.shape == (batch, 1)
    assert jnp.allclose(real, real_ref, atol=1e-5, rtol=1e-5)
    assert jnp.allclose(imag, imag_ref, atol=1e-5, rtol=1e-5)

    # Larger batch -> exercises multi-tile grid (megacore split), padding and
    # in-kernel lane strip-mining.
    batch2 = 2000
    _time2 = jax.random.uniform(kt2, (batch2, 1), jnp.float32, 0.0, 1.0)
    coord2 = jax.random.uniform(kx2, (batch2, 1), jnp.float32, -5.0, 5.0)

    real2, imag2 = schrodinger_pinn_forward(params, lower, upper, _time2, coord2)
    jax.block_until_ready((real2, imag2))

    real2_ref, imag2_ref = reference_forward(params, lower, upper, _time2, coord2)
    assert real2.shape == (batch2, 1) and imag2.shape == (batch2, 1)
    assert jnp.allclose(real2, real2_ref, atol=1e-5, rtol=1e-5)
    assert jnp.allclose(imag2, imag2_ref, atol=1e-5, rtol=1e-5)

    print("KERNEL_OK")
</pallas_src>

<mosaic_0001>
module attributes {stable_mosaic.version = 11 : i64} {
  func.func @pinn_kernel(%arg0: i32, %arg1: memref<2x128xf32, #tpu.memory_space<vmem>>, %arg2: memref<32x2xf32, #tpu.memory_space<vmem>>, %arg3: memref<32x1xf32, #tpu.memory_space<vmem>>, %arg4: memref<32x32xf32, #tpu.memory_space<vmem>>, %arg5: memref<32x1xf32, #tpu.memory_space<vmem>>, %arg6: memref<2x32xf32, #tpu.memory_space<vmem>>, %arg7: memref<2x1xf32, #tpu.memory_space<vmem>>, %arg8: memref<1x128xf32, #tpu.memory_space<vmem>>, %arg9: memref<1x128xf32, #tpu.memory_space<vmem>>) attributes {dimension_semantics = [#tpu.dimension_semantics<parallel>], iteration_bounds = array<i64: 1>, scalar_prefetch = 0 : i64, scratch_operands = 0 : i64, tpu.core_type = #tpu.core_type<tc>, window_params = [{transform_indices = @transform_0, window_bounds = array<i64: 2, 128>}, {pipeline_mode = #tpu.pipeline_mode<synchronous>, transform_indices = @transform_1, window_bounds = array<i64: 32, 2>}, {pipeline_mode = #tpu.pipeline_mode<synchronous>, transform_indices = @transform_2, window_bounds = array<i64: 32, 1>}, {pipeline_mode = #tpu.pipeline_mode<synchronous>, transform_indices = @transform_3, window_bounds = array<i64: 32, 32>}, {pipeline_mode = #tpu.pipeline_mode<synchronous>, transform_indices = @transform_4, window_bounds = array<i64: 32, 1>}, {pipeline_mode = #tpu.pipeline_mode<synchronous>, transform_indices = @transform_5, window_bounds = array<i64: 2, 32>}, {pipeline_mode = #tpu.pipeline_mode<synchronous>, transform_indices = @transform_6, window_bounds = array<i64: 2, 1>}, {transform_indices = @transform_7, window_bounds = array<i64: 1, 128>}, {transform_indices = @transform_8, window_bounds = array<i64: 1, 128>}]} {
    %c0 = arith.constant 0 : index
    %c0_0 = arith.constant 0 : index
    %0 = vector.load %arg2[%c0, %c0_0] : memref<32x2xf32, #tpu.memory_space<vmem>>, vector<32x2xf32>
    %c0_1 = arith.constant 0 : index
    %c0_2 = arith.constant 0 : index
    %1 = vector.load %arg3[%c0_1, %c0_2] : memref<32x1xf32, #tpu.memory_space<vmem>>, vector<32x1xf32>
    %c0_3 = arith.constant 0 : index
    %c0_4 = arith.constant 0 : index
    %2 = vector.load %arg4[%c0_3, %c0_4] : memref<32x32xf32, #tpu.memory_space<vmem>>, vector<32x32xf32>
    %c0_5 = arith.constant 0 : index
    %c0_6 = arith.constant 0 : index
    %3 = vector.load %arg5[%c0_5, %c0_6] : memref<32x1xf32, #tpu.memory_space<vmem>>, vector<32x1xf32>
    %c0_7 = arith.constant 0 : index
    %c0_8 = arith.constant 0 : index
    %4 = vector.load %arg6[%c0_7, %c0_8] : memref<2x32xf32, #tpu.memory_space<vmem>>, vector<2x32xf32>
    %c0_9 = arith.constant 0 : index
    %c0_10 = arith.constant 0 : index
    %5 = vector.load %arg7[%c0_9, %c0_10] : memref<2x1xf32, #tpu.memory_space<vmem>>, vector<2x1xf32>
    %c0_11 = arith.constant 0 : index
    %c0_12 = arith.constant 0 : index
    %6 = vector.load %arg1[%c0_11, %c0_12] : memref<2x128xf32, #tpu.memory_space<vmem>>, vector<2x128xf32>
    %7 = vector.extract_strided_slice %0 {offsets = [0, 0], sizes = [32, 1], strides = [1, 1]} : vector<32x2xf32> to vector<32x1xf32>
    %8 = vector.extract_strided_slice %6 {offsets = [0, 0], sizes = [1, 128], strides = [1, 1]} : vector<2x128xf32> to vector<1x128xf32>
    %9 = vector.broadcast %7 : vector<32x1xf32> to vector<32x128xf32>
    %10 = vector.broadcast %8 : vector<1x128xf32> to vector<32x128xf32>
    %11 = arith.mulf %9, %10 : vector<32x128xf32>
    %12 = vector.extract_strided_slice %0 {offsets = [0, 1], sizes = [32, 1], strides = [1, 1]} : vector<32x2xf32> to vector<32x1xf32>
    %13 = vector.extract_strided_slice %6 {offsets = [1, 0], sizes = [1, 128], strides = [1, 1]} : vector<2x128xf32> to vector<1x128xf32>
    %14 = vector.broadcast %12 : vector<32x1xf32> to vector<32x128xf32>
    %15 = vector.broadcast %13 : vector<1x128xf32> to vector<32x128xf32>
    %16 = arith.mulf %14, %15 : vector<32x128xf32>
    %17 = arith.addf %11, %16 : vector<32x128xf32>
    %18 = vector.broadcast %1 : vector<32x1xf32> to vector<32x128xf32>
    %19 = arith.addf %17, %18 : vector<32x128xf32>
    %20 = math.tanh %19 : vector<32x128xf32>
    %cst = arith.constant dense<0.000000e+00> : vector<32x128xf32>
    %21 = tpu.matmul %2, %20, %cst {dimension_numbers = #tpu.dot_dimension_numbers<[1], [0], [0], [1], [0, 0, 1, 1], [], []>, precision = #tpu.contract_precision<fp32>} : vector<32x32xf32>, vector<32x128xf32>, vector<32x128xf32> -> vector<32x128xf32>
    %22 = vector.broadcast %3 : vector<32x1xf32> to vector<32x128xf32>
    %23 = arith.addf %21, %22 : vector<32x128xf32>
    %24 = math.tanh %23 : vector<32x128xf32>
    %cst_13 = arith.constant dense<0.000000e+00> : vector<2x128xf32>
    %25 = tpu.matmul %4, %24, %cst_13 {dimension_numbers = #tpu.dot_dimension_numbers<[1], [0], [0], [1], [0, 0, 1, 1], [], []>, precision = #tpu.contract_precision<fp32>} : vector<2x32xf32>, vector<32x128xf32>, vector<2x128xf32> -> vector<2x128xf32>
    %26 = vector.broadcast %5 : vector<2x1xf32> to vector<2x128xf32>
    %27 = arith.addf %25, %26 : vector<2x128xf32>
    %28 = vector.extract_strided_slice %27 {offsets = [0, 0], sizes = [1, 128], strides = [1, 1]} : vector<2x128xf32> to vector<1x128xf32>
    %c0_14 = arith.constant 0 : index
    %c0_15 = arith.constant 0 : index
    %29 = vector.load %arg8[%c0_14, %c0_15] : memref<1x128xf32, #tpu.memory_space<vmem>>, vector<1x128xf32>
    tpu.vector_store %arg8[%c0_14, %c0_15], %28 {strides = array<i32>} : memref<1x128xf32, #tpu.memory_space<vmem>>, vector<1x128xf32>,
    %30 = vector.extract_strided_slice %27 {offsets = [1, 0], sizes = [1, 128], strides = [1, 1]} : vector<2x128xf32> to vector<1x128xf32>
    %c0_16 = arith.constant 0 : index
    %c0_17 = arith.constant 0 : index
    %31 = vector.load %arg9[%c0_16, %c0_17] : memref<1x128xf32, #tpu.memory_space<vmem>>, vector<1x128xf32>
    tpu.vector_store %arg9[%c0_16, %c0_17], %30 {strides = array<i32>} : memref<1x128xf32, #tpu.memory_space<vmem>>, vector<1x128xf32>,
    return
  }
  func.func @transform_0(%arg0: i32) -> (i32, i32) {
    %c0_i32 = arith.constant 0 : i32
    %c0_i32_0 = arith.constant 0 : i32
    return %c0_i32, %arg0 : i32, i32
  }
  func.func @transform_1(%arg0: i32) -> (i32, i32) {
    %c0_i32 = arith.constant 0 : i32
    %c0_i32_0 = arith.constant 0 : i32
    %c0_i32_1 = arith.constant 0 : i32
    return %c0_i32, %c0_i32_0 : i32, i32
  }
  func.func @transform_2(%arg0: i32) -> (i32, i32) {
    %c0_i32 = arith.constant 0 : i32
    %c0_i32_0 = arith.constant 0 : i32
    %c0_i32_1 = arith.constant 0 : i32
    return %c0_i32, %c0_i32_0 : i32, i32
  }
  func.func @transform_3(%arg0: i32) -> (i32, i32) {
    %c0_i32 = arith.constant 0 : i32
    %c0_i32_0 = arith.constant 0 : i32
    %c0_i32_1 = arith.constant 0 : i32
    return %c0_i32, %c0_i32_0 : i32, i32
  }
  func.func @transform_4(%arg0: i32) -> (i32, i32) {
    %c0_i32 = arith.constant 0 : i32
    %c0_i32_0 = arith.constant 0 : i32
    %c0_i32_1 = arith.constant 0 : i32
    return %c0_i32, %c0_i32_0 : i32, i32
  }
  func.func @transform_5(%arg0: i32) -> (i32, i32) {
    %c0_i32 = arith.constant 0 : i32
    %c0_i32_0 = arith.constant 0 : i32
    %c0_i32_1 = arith.constant 0 : i32
    return %c0_i32, %c0_i32_0 : i32, i32
  }
  func.func @transform_6(%arg0: i32) -> (i32, i32) {
    %c0_i32 = arith.constant 0 : i32
    %c0_i32_0 = arith.constant 0 : i32
    %c0_i32_1 = arith.constant 0 : i32
    return %c0_i32, %c0_i32_0 : i32, i32
  }
  func.func @transform_7(%arg0: i32) -> (i32, i32) {
    %c0_i32 = arith.constant 0 : i32
    %c0_i32_0 = arith.constant 0 : i32
    return %c0_i32, %arg0 : i32, i32
  }
  func.func @transform_8(%arg0: i32) -> (i32, i32) {
    %c0_i32 = arith.constant 0 : i32
    %c0_i32_0 = arith.constant 0 : i32
    return %c0_i32, %arg0 : i32, i32
  }
}

</mosaic_0001>

<llo_original>
// kernel: tpu_custom_call.1
$region0: #{tpu_custom_call.1}
  #allocation0 [shape = 'u32[]', space=smem, size = 0x4, offset = 0x4, fixed_abs, tag = 'smem constant byte address 0x4 - core index']
  #allocation1 [shape = 'u32[144,128]{1,0:T(1,128)}', space=vmem, size = 0x12000, scoped, tag = 'internal scratch']
  %s0 = inlined_call_operand.vmem [shape: f32[2,128], index: 0, kind: input, shape index: {}]
  %s1 = inlined_call_operand.vmem [shape: f32[32,2], index: 1, kind: input, shape index: {}]
  %s2 = inlined_call_operand.vmem [shape: f32[32,1], index: 2, kind: input, shape index: {}]
  %s3 = inlined_call_operand.vmem [shape: f32[32,32], index: 3, kind: input, shape index: {}]
  %s4 = inlined_call_operand.vmem [shape: f32[32,1], index: 4, kind: input, shape index: {}]
  %s5 = inlined_call_operand.vmem [shape: f32[2,32], index: 5, kind: input, shape index: {}]
  %s6 = inlined_call_operand.vmem [shape: f32[2,1], index: 6, kind: input, shape index: {}]
  %s7 = inlined_call_operand.hbm [shape: f32[1,128], index: 7, kind: output, shape index: {0}]
  %s8 = inlined_call_operand.hbm [shape: f32[1,128], index: 8, kind: output, shape index: {1}]
  %9 = xla_tuple %s7, %s8
  %s10 = sld [smem:[#allocation0]]
  $region46: #{tpu_custom_call.1} parent=0
    _
  %s12 = ssub.s32 1, %s10
  %s13 = scalar_select 0, %s12, %s10
  $region1: #{tpu_custom_call.1} parent=0
    #allocation2 [shape = 'u8[512]{0}', space=vmem, size = 0x400, scoped, tag = 'output window, operand 0, single buffered']
    #allocation3 [shape = 's32[1]{0}', space=sflag, size = 0x4, scoped, tag = 'scoped memory for tpu_custom_call.1']
    #allocation4 [shape = 'u8[512]{0}', space=vmem, size = 0x400, scoped, tag = 'output window, operand 1, single buffered']
    #allocation5 [shape = 's32[1]{0}', space=sflag, size = 0x4, scoped, tag = 'scoped memory for tpu_custom_call.1']
    %14 = vsyncpa [#allocation3], 0
    %15 = vsyncpa [#allocation5], 0
    // Predicated region
    $region2: #{tpu_custom_call.1} parent=1 // pred_check
      _
    $region3: #{tpu_custom_call.1} parent=1 // pred_check_branch
      %17 = sbr.rel (0) target = $region5
    $region4: #{tpu_custom_call.1} parent=1 // pred_region
      _
    $region5: #{tpu_custom_call.1} parent=1 // pred_fallthru
      _
    // Predicated region
    $region6: #{tpu_custom_call.1} parent=1 // pred_check
      _
    $region7: #{tpu_custom_call.1} parent=1 // pred_check_branch
      %19 = sbr.rel (0) target = $region9
    $region8: #{tpu_custom_call.1} parent=1 // pred_region
      _
    $region9: #{tpu_custom_call.1} parent=1 // pred_fallthru
      _
    // Predicated region
    $region10: #{tpu_custom_call.1} parent=1 // pred_check
      _
    $region11: #{tpu_custom_call.1} parent=1 // pred_check_branch
      %21 = sbr.rel (0) target = $region13
    $region12: #{tpu_custom_call.1} parent=1 // pred_region
      _
    $region13: #{tpu_custom_call.1} parent=1 // pred_fallthru
      _
    // Predicated region
    $region14: #{tpu_custom_call.1} parent=1 // pred_check
      _
    $region15: #{tpu_custom_call.1} parent=1 // pred_check_branch
      %23 = sbr.rel (0) target = $region17
    $region16: #{tpu_custom_call.1} parent=1 // pred_region
      _
    $region17: #{tpu_custom_call.1} parent=1 // pred_fallthru
      _
    // Predicated region
    $region18: #{tpu_custom_call.1} parent=1 // pred_check
      _
    $region19: #{tpu_custom_call.1} parent=1 // pred_check_branch
      %25 = sbr.rel (0) target = $region21
    $region20: #{tpu_custom_call.1} parent=1 // pred_region
      _
    $region21: #{tpu_custom_call.1} parent=1 // pred_fallthru
      _
    // Predicated region
    $region22: #{tpu_custom_call.1} parent=1 // pred_check
      _
    $region23: #{tpu_custom_call.1} parent=1 // pred_check_branch
      %27 = sbr.rel (0) target = $region25
    $region24: #{tpu_custom_call.1} parent=1 // pred_region
      _
    $region25: #{tpu_custom_call.1} parent=1 // pred_fallthru
      _
    // Predicated region
    $region26: #{tpu_custom_call.1} parent=1 // pred_check
      _
    $region27: #{tpu_custom_call.1} parent=1 // pred_check_branch
      %29 = sbr.rel (0) target = $region29
    $region28: #{tpu_custom_call.1} parent=1 // pred_region
      _
    $region29: #{tpu_custom_call.1} parent=1 // pred_fallthru
      _
    %v30 = vld [vmem:[%s1] sm:$0xff]
    %v31 = vld [vmem:[%s1 + $0x8] sm:$0xff]
    %v32 = vld [vmem:[%s1 + $0x10] sm:$0xff]
    %v33 = vld [vmem:[%s1 + $0x18] sm:$0xff]
    %v34 = vld [vmem:[%s2] sm:$0xff]
    %v35 = vld [vmem:[%s2 + $0x8] sm:$0xff]
    %v36 = vld [vmem:[%s2 + $0x10] sm:$0xff]
    %v37 = vld [vmem:[%s2 + $0x18] sm:$0xff]
    %v38 = vld [vmem:[%s3] sm:$0xff]
    %v39 = vld [vmem:[%s3 + $0x8] sm:$0xff]
    %v40 = vld [vmem:[%s3 + $0x10] sm:$0xff]
    %v41 = vld [vmem:[%s3 + $0x18] sm:$0xff]
    %v42 = vld [vmem:[%s4] sm:$0xff]
    %v43 = vld [vmem:[%s4 + $0x8] sm:$0xff]
    %v44 = vld [vmem:[%s4 + $0x10] sm:$0xff]
    %v45 = vld [vmem:[%s4 + $0x18] sm:$0xff]
    %v46 = vld [vmem:[%s5] sm:$0x3]
    %v47 = vld [vmem:[%s6] sm:$0x3]
    %v48 = vld [vmem:[%s0] sm:$0x3]
    %50 = vset.pattern.permute.xlu0 0
    %51 = vperm.xlu0 %50, %v30
    %v52 = vpop.permute.xlu0 %51
    %55 = vset.pattern.permute.xlu0 0
    %56 = vperm.xlu0 %55, %v31
    %v57 = vpop.permute.xlu0 %56
    %60 = vset.pattern.permute.xlu0 0
    %61 = vperm.xlu0 %60, %v32
    %v62 = vpop.permute.xlu0 %61
    %65 = vset.pattern.permute.xlu0 0
    %66 = vperm.xlu0 %65, %v33
    %v67 = vpop.permute.xlu0 %66
    %v69 = vlaneseq
    %v70 = vshrl.u32 %v69, 7
    %v71 = vsub.s32 0, %v70
    %v72 = vrot.slane %v48, %v71
    %v73 = vmul.f32 %v52, %v72
    %v74 = vmul.f32 %v57, %v72
    %v75 = vmul.f32 %v62, %v72
    %v76 = vmul.f32 %v67, %v72
    %77 = vset.pattern.permute.xlu0 1
    %78 = vperm.xlu0 %77, %v30
    %v79 = vpop.permute.xlu0 %78
    %81 = vset.pattern.permute.xlu0 1
    %82 = vperm.xlu0 %81, %v31
    %v83 = vpop.permute.xlu0 %82
    %85 = vset.pattern.permute.xlu0 1
    %86 = vperm.xlu0 %85, %v32
    %v87 = vpop.permute.xlu0 %86
    %89 = vset.pattern.permute.xlu0 1
    %90 = vperm.xlu0 %89, %v33
    %v91 = vpop.permute.xlu0 %90
    %v93 = vlaneseq
    %v94 = vshrl.u32 %v93, 7
    %v95 = vsub.s32 1, %v94
    %v96 = vrot.slane %v48, %v95
    %v97 = vmul.f32 %v79, %v96
    %v98 = vmul.f32 %v83, %v96
    %v99 = vmul.f32 %v87, %v96
    %v100 = vmul.f32 %v91, %v96
    %v101 = vadd.f32 %v73, %v97
    %v102 = vadd.f32 %v74, %v98
    %v103 = vadd.f32 %v75, %v99
    %v104 = vadd.f32 %v76, %v100
    %106 = vset.pattern.permute.xlu0 0
    %107 = vperm.xlu0 %106, %v34
    %v108 = vpop.permute.xlu0 %107
    %111 = vset.pattern.permute.xlu0 0
    %112 = vperm.xlu0 %111, %v35
    %v113 = vpop.permute.xlu0 %112
    %116 = vset.pattern.permute.xlu0 0
    %117 = vperm.xlu0 %116, %v36
    %v118 = vpop.permute.xlu0 %117
    %121 = vset.pattern.permute.xlu0 0
    %122 = vperm.xlu0 %121, %v37
    %v123 = vpop.permute.xlu0 %122
    %v125 = vadd.f32 %v101, %v108
    %v126 = vadd.f32 %v102, %v113
    %v127 = vadd.f32 %v103, %v118
    %v128 = vadd.f32 %v104, %v123
    %v129 = vtanh.pop %v125
    %v130 = vtanh.pop %v126
    %v131 = vtanh.pop %v127
    %v132 = vtanh.pop %v128
    %134 = vset.pattern.permute.xlu0 0
    %135 = vperm.xlu0 %134, %v42
    %v136 = vpop.permute.xlu0 %135
    %139 = vset.pattern.permute.xlu0 0
    %140 = vperm.xlu0 %139, %v43
    %v141 = vpop.permute.xlu0 %140
    %144 = vset.pattern.permute.xlu0 0
    %145 = vperm.xlu0 %144, %v44
    %v146 = vpop.permute.xlu0 %145
    %149 = vset.pattern.permute.xlu0 0
    %150 = vperm.xlu0 %149, %v45
    %v151 = vpop.permute.xlu0 %150
    %vm153 = vcmask 261120
    %v155 = vsel %vm153, %v38, 0
    %v158 = vsel %vm153, %v39, 0
    %v161 = vsel %vm153, %v40, 0
    %v164 = vsel %vm153, %v41, 0
    %166 = vmatprep.subr.mxu0 0.0
    %v167 = vand.u32 %v129, 4294901760
    %168 = vmatpush1.msra.mxu0 %v167
    %169 = vmatprep.subr.mxu0 0.0
    %v170 = vand.u32 %v130, 4294901760
    %171 = vmatpush1.msra.mxu0 %v170
    %172 = vmatprep.subr.mxu0 0.0
    %v173 = vand.u32 %v131, 4294901760
    %174 = vmatpush1.msra.mxu0 %v173
    %175 = vmatprep.subr.mxu0 0.0
    %v176 = vand.u32 %v132, 4294901760
    %177 = vmatpush1.msra.mxu0 %v176
    %178 = vmatprep.subr.mxu0 0.0
    %179 = vmatpush1.msra.mxu0 0.0
    %180 = vmatprep.subr.mxu0 0.0
    %181 = vmatpush1.msra.mxu0 0.0
    %182 = vmatprep.subr.mxu0 0.0
    %183 = vmatpush1.msra.mxu0 0.0
    %184 = vmatprep.subr.mxu0 0.0
    %185 = vmatpush1.msra.mxu0 0.0
    %186 = vmatprep.subr.mxu0 0.0
    %187 = vmatpush1.msra.mxu0 0.0
    %188 = vmatprep.subr.mxu0 0.0
    %189 = vmatpush1.msra.mxu0 0.0
    %190 = vmatprep.subr.mxu0 0.0
    %191 = vmatpush1.msra.mxu0 0.0
    %192 = vmatprep.subr.mxu0 0.0
    %193 = vmatpush1.msra.mxu0 0.0
    %194 = vmatprep.subr.mxu0 0.0
    %195 = vmatpush1.msra.mxu0 0.0
    %196 = vmatprep.subr.mxu0 0.0
    %197 = vmatpush1.msra.mxu0 0.0
    %198 = vmatprep.subr.mxu0 0.0
    %199 = vmatpush1.msra.mxu0 0.0
    %200 = vmatprep.subr.mxu0 0.0
    %201 = vmatpush1.msra.mxu0 0.0
    %202 = vmatprep.subr.mxu0 0.0
    %203 = vmatpush1.msra.mxu0 0.0
    %204 = vmatprep.subr.mxu0 0.0
    %205 = vmatpush1.msra.mxu0 0.0
    %206 = vmatprep.subr.mxu0 0.0
    %207 = vmatpush1.msra.mxu0 0.0
    %208 = vmatprep.subr.mxu0 0.0
    %209 = vmatpush1.msra.mxu0 0.0
    %210 = vmatprep.subr.mxu0 0.0
    %211 = vmatpush1.msra.mxu0 0.0
    %212 = vmatprep.subr.mxu0 0.0
    %213 = vmatpush1.msra.mxu0 0.0
    %214 = vmatprep.subr.mxu0 0.0
    %215 = vmatpush1.msra.mxu0 0.0
    %216 = vmatprep.subr.mxu0 0.0
    %217 = vmatpush1.msra.mxu0 0.0
    %218 = vmatprep.subr.mxu0 0.0
    %219 = vmatpush1.msra.mxu0 0.0
    %220 = vmatprep.subr.mxu0 0.0
    %221 = vmatpush1.msra.mxu0 0.0
    %222 = vmatprep.subr.mxu0 0.0
    %223 = vmatpush1.msra.mxu0 0.0
    %224 = vmatprep.subr.mxu0 0.0
    %225 = vmatpush1.msra.mxu0 0.0
    %226 = vmatprep.subr.mxu0 0.0
    %227 = vmatpush1.msra.mxu0 0.0
    %228 = vmatprep.subr.mxu0 0.0
    %229 = vmatpush1.msra.mxu0 0.0
    %230 = vmatprep.subr.mxu0 0.0
    %231 = vmatpush1.msra.mxu0 0.0
    %232 = vmatprep.subr.mxu0 0.0
    %233 = vmatpush1.msra.mxu0 0.0
    %234 = vmatprep.mubr.f32.mxu0 0.0
    %v235 = vand.u32 %v155, 4294901760
    %v236 = vsub.f32 %v155, %v235
    %v237 = vand.u32 %v236, 4294901760
    %v238 = vsub.f32 %v236, %v237
    %v239 = vand.u32 %v238, 4294901760
    %240 = vmatmul.mubr.f32.gmra.mrb[0].mxu0 %v239
    %v241 = vpop.f32.mrb[0].mxu0
    %v242 = vadd.f32 %v136, %v241
    %v243 = vpop.f32.mrb[0].mxu0
    %244 = vmatprep.mubr.f32.mxu0 0.0
    %v245 = vand.u32 %v158, 4294901760
    %v246 = vsub.f32 %v158, %v245
    %v247 = vand.u32 %v246, 4294901760
    %v248 = vsub.f32 %v246, %v247
    %v249 = vand.u32 %v248, 4294901760
    %250 = vmatmul.mubr.f32.gmra.mrb[0].mxu0 %v249
    %v251 = vpop.f32.mrb[0].mxu0
    %v252 = vadd.f32 %v141, %v251
    %v253 = vpop.f32.mrb[0].mxu0
    %254 = vmatprep.mubr.f32.mxu0 0.0
    %v255 = vand.u32 %v161, 4294901760
    %v256 = vsub.f32 %v161, %v255
    %v257 = vand.u32 %v256, 4294901760
    %v258 = vsub.f32 %v256, %v257
    %v259 = vand.u32 %v258, 4294901760
    %260 = vmatmul.mubr.f32.gmra.mrb[0].mxu0 %v259
    %v261 = vpop.f32.mrb[0].mxu0
    %v262 = vadd.f32 %v146, %v261
    %v263 = vpop.f32.mrb[0].mxu0
    %264 = vmatprep.mubr.f32.mxu0 0.0
    %v265 = vand.u32 %v164, 4294901760
    %v266 = vsub.f32 %v164, %v265
    %v267 = vand.u32 %v266, 4294901760
    %v268 = vsub.f32 %v266, %v267
    %v269 = vand.u32 %v268, 4294901760
    %270 = vmatmul.mubr.f32.gmra.mrb[0].mxu0 %v269
    %v271 = vpop.f32.mrb[0].mxu0
    %v272 = vadd.f32 %v151, %v271
    %v273 = vpop.f32.mrb[0].mxu0
    %274 = vdwg.mxu0
    %275 = vmatprep.subr.mxu0 0.0
    %v276 = vand.u32 %v129, 4294901760
    %v277 = vsub.f32 %v129, %v276
    %v278 = vand.u32 %v277, 4294901760
    %v279 = vsub.f32 %v277, %v278
    %v280 = vand.u32 %v279, 4294901760
    %281 = vmatpush1.msra.mxu0 %v280
    %282 = vmatprep.subr.mxu0 0.0
    %v283 = vand.u32 %v130, 4294901760
    %v284 = vsub.f32 %v130, %v283
    %v285 = vand.u32 %v284, 4294901760
    %v286 = vsub.f32 %v284, %v285
    %v287 = vand.u32 %v286, 4294901760
    %288 = vmatpush1.msra.mxu0 %v287
    %289 = vmatprep.subr.mxu0 0.0
    %v290 = vand.u32 %v131, 4294901760
    %v291 = vsub.f32 %v131, %v290
    %v292 = vand.u32 %v291, 4294901760
    %v293 = vsub.f32 %v291, %v292
    %v294 = vand.u32 %v293, 4294901760
    %295 = vmatpush1.msra.mxu0 %v294
    %296 = vmatprep.subr.mxu0 0.0
    %v297 = vand.u32 %v132, 4294901760
    %v298 = vsub.f32 %v132, %v297
    %v299 = vand.u32 %v298, 4294901760
    %v300 = vsub.f32 %v298, %v299
    %v301 = vand.u32 %v300, 4294901760
    %302 = vmatpush1.msra.mxu0 %v301
    %303 = vmatprep.subr.mxu0 0.0
    %304 = vmatpush1.msra.mxu0 0.0
    %305 = vmatprep.subr.mxu0 0.0
    %306 = vmatpush1.msra.mxu0 0.0
    %307 = vmatprep.subr.mxu0 0.0
    %308 = vmatpush1.msra.mxu0 0.0
    %309 = vmatprep.subr.mxu0 0.0
    %310 = vmatpush1.msra.mxu0 0.0
    %311 = vmatprep.subr.mxu0 0.0
    %312 = vmatpush1.msra.mxu0 0.0
    %313 = vmatprep.subr.mxu0 0.0
    %314 = vmatpush1.msra.mxu0 0.0
    %315 = vmatprep.subr.mxu0 0.0
    %316 = vmatpush1.msra.mxu0 0.0
    %317 = vmatprep.subr.mxu0 0.0
    %318 = vmatpush1.msra.mxu0 0.0
    %319 = vmatprep.subr.mxu0 0.0
    %320 = vmatpush1.msra.mxu0 0.0
    %321 = vmatprep.subr.mxu0 0.0
    %322 = vmatpush1.msra.mxu0 0.0
    %323 = vmatprep.subr.mxu0 0.0
    %324 = vmatpush1.msra.mxu0 0.0
    %325 = vmatprep.subr.mxu0 0.0
    %326 = vmatpush1.msra.mxu0 0.0
    %327 = vmatprep.subr.mxu0 0.0
    %328 = vmatpush1.msra.mxu0 0.0
    %329 = vmatprep.subr.mxu0 0.0
    %330 = vmatpush1.msra.mxu0 0.0
    %331 = vmatprep.subr.mxu0 0.0
    %332 = vmatpush1.msra.mxu0 0.0
    %333 = vmatprep.subr.mxu0 0.0
    %334 = vmatpush1.msra.mxu0 0.0
    %335 = vmatprep.subr.mxu0 0.0
    %336 = vmatpush1.msra.mxu0 0.0
    %337 = vmatprep.subr.mxu0 0.0
    %338 = vmatpush1.msra.mxu0 0.0
    %339 = vmatprep.subr.mxu0 0.0
    %340 = vmatpush1.msra.mxu0 0.0
    %341 = vmatprep.subr.mxu0 0.0
    %342 = vmatpush1.msra.mxu0 0.0
    %343 = vmatprep.subr.mxu0 0.0
    %344 = vmatpush1.msra.mxu0 0.0
    %345 = vmatprep.subr.mxu0 0.0
    %346 = vmatpush1.msra.mxu0 0.0
    %347 = vmatprep.subr.mxu0 0.0
    %348 = vmatpush1.msra.mxu0 0.0
    %349 = vmatprep.subr.mxu0 0.0
    %350 = vmatpush1.msra.mxu0 0.0
    %351 = vmatprep.subr.mxu0 0.0
    %352 = vmatpush1.msra.mxu0 0.0
    %353 = vmatprep.subr.mxu0 0.0
    %354 = vmatpush1.msra.mxu0 0.0
    %355 = vmatprep.subr.mxu0 0.0
    %356 = vmatpush1.msra.mxu0 0.0
    %357 = vmatprep.subr.mxu0 0.0
    %358 = vmatpush1.msra.mxu0 0.0
    %359 = vmatprep.mubr.f32.mxu0 0.0
    %v360 = vand.u32 %v155, 4294901760
    %361 = vmatmul.mubr.f32.gmra.mrb[0].mxu0 %v360
    %v362 = vpop.f32.mrb[0].mxu0
    %v363 = vadd.f32 %v242, %v362
    %v364 = vpop.f32.mrb[0].mxu0
    %365 = vmatprep.mubr.f32.mxu0 0.0
    %v366 = vand.u32 %v158, 4294901760
    %367 = vmatmul.mubr.f32.gmra.mrb[0].mxu0 %v366
    %v368 = vpop.f32.mrb[0].mxu0
    %v369 = vadd.f32 %v252, %v368
    %v370 = vpop.f32.mrb[0].mxu0
    %371 = vmatprep.mubr.f32.mxu0 0.0
    %v372 = vand.u32 %v161, 4294901760
    %373 = vmatmul.mubr.f32.gmra.mrb[0].mxu0 %v372
    %v374 = vpop.f32.mrb[0].mxu0
    %v375 = vadd.f32 %v262, %v374
    %v376 = vpop.f32.mrb[0].mxu0
    %377 = vmatprep.mubr.f32.mxu0 0.0
    %v378 = vand.u32 %v164, 4294901760
    %379 = vmatmul.mubr.f32.gmra.mrb[0].mxu0 %v378
    %v380 = vpop.f32.mrb[0].mxu0
    %v381 = vadd.f32 %v272, %v380
    %v382 = vpop.f32.mrb[0].mxu0
    %383 = vdwg.mxu0
    %384 = vmatprep.subr.mxu0 0.0
    %v385 = vand.u32 %v129, 4294901760
    %v386 = vsub.f32 %v129, %v385
    %387 = vmatpush1.msra.mxu0 %v386
    %388 = vmatprep.subr.mxu0 0.0
    %v389 = vand.u32 %v130, 4294901760
    %v390 = vsub.f32 %v130, %v389
    %391 = vmatpush1.msra.mxu0 %v390
    %392 = vmatprep.subr.mxu0 0.0
    %v393 = vand.u32 %v131, 4294901760
    %v394 = vsub.f32 %v131, %v393
    %395 = vmatpush1.msra.mxu0 %v394
    %396 = vmatprep.subr.mxu0 0.0
    %v397 = vand.u32 %v132, 4294901760
    %v398 = vsub.f32 %v132, %v397
    %399 = vmatpush1.msra.mxu0 %v398
    %400 = vmatprep.subr.mxu0 0.0
    %401 = vmatpush1.msra.mxu0 0.0
    %402 = vmatprep.subr.mxu0 0.0
    %403 = vmatpush1.msra.mxu0 0.0
    %404 = vmatprep.subr.mxu0 0.0
    %405 = vmatpush1.msra.mxu0 0.0
    %406 = vmatprep.subr.mxu0 0.0
    %407 = vmatpush1.msra.mxu0 0.0
    %408 = vmatprep.subr.mxu0 0.0
    %409 = vmatpush1.msra.mxu0 0.0
    %410 = vmatprep.subr.mxu0 0.0
    %411 = vmatpush1.msra.mxu0 0.0
    %412 = vmatprep.subr.mxu0 0.0
    %413 = vmatpush1.msra.mxu0 0.0
    %414 = vmatprep.subr.mxu0 0.0
    %415 = vmatpush1.msra.mxu0 0.0
    %416 = vmatprep.subr.mxu0 0.0
    %417 = vmatpush1.msra.mxu0 0.0
    %418 = vmatprep.subr.mxu0 0.0
    %419 = vmatpush1.msra.mxu0 0.0
    %420 = vmatprep.subr.mxu0 0.0
    %421 = vmatpush1.msra.mxu0 0.0
    %422 = vmatprep.subr.mxu0 0.0
    %423 = vmatpush1.msra.mxu0 0.0
    %424 = vmatprep.subr.mxu0 0.0
    %425 = vmatpush1.msra.mxu0 0.0
    %426 = vmatprep.subr.mxu0 0.0
    %427 = vmatpush1.msra.mxu0 0.0
    %428 = vmatprep.subr.mxu0 0.0
    %429 = vmatpush1.msra.mxu0 0.0
    %430 = vmatprep.subr.mxu0 0.0
    %431 = vmatpush1.msra.mxu0 0.0
    %432 = vmatprep.subr.mxu0 0.0
    %433 = vmatpush1.msra.mxu0 0.0
    %434 = vmatprep.subr.mxu0 0.0
    %435 = vmatpush1.msra.mxu0 0.0
    %436 = vmatprep.subr.mxu0 0.0
    %437 = vmatpush1.msra.mxu0 0.0
    %438 = vmatprep.subr.mxu0 0.0
    %439 = vmatpush1.msra.mxu0 0.0
    %440 = vmatprep.subr.mxu0 0.0
    %441 = vmatpush1.msra.mxu0 0.0
    %442 = vmatprep.subr.mxu0 0.0
    %443 = vmatpush1.msra.mxu0 0.0
    %444 = vmatprep.subr.mxu0 0.0
    %445 = vmatpush1.msra.mxu0 0.0
    %446 = vmatprep.subr.mxu0 0.0
    %447 = vmatpush1.msra.mxu0 0.0
    %448 = vmatprep.subr.mxu0 0.0
    %449 = vmatpush1.msra.mxu0 0.0
    %450 = vmatprep.subr.mxu0 0.0
    %451 = vmatpush1.msra.mxu0 0.0
    %452 = vmatprep.subr.mxu0 0.0
    %453 = vmatpush1.msra.mxu0 0.0
    %454 = vmatprep.subr.mxu0 0.0
    %455 = vmatpush1.msra.mxu0 0.0
    %456 = vmatprep.mubr.f32.mxu0 0.0
    %v457 = vand.u32 %v155, 4294901760
    %v458 = vsub.f32 %v155, %v457
    %459 = vmatmul.mubr.f32.gmra.mrb[0].mxu0 %v458
    %v460 = vpop.f32.mrb[0].mxu0
    %v461 = vadd.f32 %v363, %v460
    %v462 = vpop.f32.mrb[0].mxu0
    %463 = vmatprep.mubr.f32.mxu0 0.0
    %v464 = vand.u32 %v158, 4294901760
    %v465 = vsub.f32 %v158, %v464
    %466 = vmatmul.mubr.f32.gmra.mrb[0].mxu0 %v465
    %v467 = vpop.f32.mrb[0].mxu0
    %v468 = vadd.f32 %v369, %v467
    %v469 = vpop.f32.mrb[0].mxu0
    %470 = vmatprep.mubr.f32.mxu0 0.0
    %v471 = vand.u32 %v161, 4294901760
    %v472 = vsub.f32 %v161, %v471
    %473 = vmatmul.mubr.f32.gmra.mrb[0].mxu0 %v472
    %v474 = vpop.f32.mrb[0].mxu0
    %v475 = vadd.f32 %v375, %v474
    %v476 = vpop.f32.mrb[0].mxu0
    %477 = vmatprep.mubr.f32.mxu0 0.0
    %v478 = vand.u32 %v164, 4294901760
    %v479 = vsub.f32 %v164, %v478
    %480 = vmatmul.mubr.f32.gmra.mrb[0].mxu0 %v479
    %v481 = vpop.f32.mrb[0].mxu0
    %v482 = vadd.f32 %v381, %v481
    %v483 = vpop.f32.mrb[0].mxu0
    %484 = vdwg.mxu0
    %485 = vmatprep.subr.mxu0 0.0
    %v486 = vand.u32 %v129, 4294901760
    %487 = vmatpush1.msra.mxu0 %v486
    %488 = vmatprep.subr.mxu0 0.0
    %v489 = vand.u32 %v130, 4294901760
    %490 = vmatpush1.msra.mxu0 %v489
    %491 = vmatprep.subr.mxu0 0.0
    %v492 = vand.u32 %v131, 4294901760
    %493 = vmatpush1.msra.mxu0 %v492
    %494 = vmatprep.subr.mxu0 0.0
    %v495 = vand.u32 %v132, 4294901760
    %496 = vmatpush1.msra.mxu0 %v495
    %497 = vmatprep.subr.mxu0 0.0
    %498 = vmatpush1.msra.mxu0 0.0
    %499 = vmatprep.subr.mxu0 0.0
    %500 = vmatpush1.msra.mxu0 0.0
    %501 = vmatprep.subr.mxu0 0.0
    %502 = vmatpush1.msra.mxu0 0.0
    %503 = vmatprep.subr.mxu0 0.0
    %504 = vmatpush1.msra.mxu0 0.0
    %505 = vmatprep.subr.mxu0 0.0
    %506 = vmatpush1.msra.mxu0 0.0
    %507 = vmatprep.subr.mxu0 0.0
    %508 = vmatpush1.msra.mxu0 0.0
    %509 = vmatprep.subr.mxu0 0.0
    %510 = vmatpush1.msra.mxu0 0.0
    %511 = vmatprep.subr.mxu0 0.0
    %512 = vmatpush1.msra.mxu0 0.0
    %513 = vmatprep.subr.mxu0 0.0
    %514 = vmatpush1.msra.mxu0 0.0
    %515 = vmatprep.subr.mxu0 0.0
    %516 = vmatpush1.msra.mxu0 0.0
    %517 = vmatprep.subr.mxu0 0.0
    %518 = vmatpush1.msra.mxu0 0.0
    %519 = vmatprep.subr.mxu0 0.0
    %520 = vmatpush1.msra.mxu0 0.0
    %521 = vmatprep.subr.mxu0 0.0
    %522 = vmatpush1.msra.mxu0 0.0
    %523 = vmatprep.subr.mxu0 0.0
    %524 = vmatpush1.msra.mxu0 0.0
    %525 = vmatprep.subr.mxu0 0.0
    %526 = vmatpush1.msra.mxu0 0.0
    %527 = vmatprep.subr.mxu0 0.0
    %528 = vmatpush1.msra.mxu0 0.0
    %529 = vmatprep.subr.mxu0 0.0
    %530 = vmatpush1.msra.mxu0 0.0
    %531 = vmatprep.subr.mxu0 0.0
    %532 = vmatpush1.msra.mxu0 0.0
    %533 = vmatprep.subr.mxu0 0.0
    %534 = vmatpush1.msra.mxu0 0.0
    %535 = vmatprep.subr.mxu0 0.0
    %536 = vmatpush1.msra.mxu0 0.0
    %537 = vmatprep.subr.mxu0 0.0
    %538 = vmatpush1.msra.mxu0 0.0
    %539 = vmatprep.subr.mxu0 0.0
    %540 = vmatpush1.msra.mxu0 0.0
    %541 = vmatprep.subr.mxu0 0.0
    %542 = vmatpush1.msra.mxu0 0.0
    %543 = vmatprep.subr.mxu0 0.0
    %544 = vmatpush1.msra.mxu0 0.0
    %545 = vmatprep.subr.mxu0 0.0
    %546 = vmatpush1.msra.mxu0 0.0
    %547 = vmatprep.subr.mxu0 0.0
    %548 = vmatpush1.msra.mxu0 0.0
    %549 = vmatprep.subr.mxu0 0.0
    %550 = vmatpush1.msra.mxu0 0.0
    %551 = vmatprep.subr.mxu0 0.0
    %552 = vmatpush1.msra.mxu0 0.0
    %553 = vmatprep.mubr.f32.mxu0 0.0
    %v554 = vand.u32 %v155, 4294901760
    %v555 = vsub.f32 %v155, %v554
    %v556 = vand.u32 %v555, 4294901760
    %557 = vmatmul.mubr.f32.gmra.mrb[0].mxu0 %v556
    %v558 = vpop.f32.mrb[0].mxu0
    %v559 = vadd.f32 %v461, %v558
    %v560 = vpop.f32.mrb[0].mxu0
    %561 = vmatprep.mubr.f32.mxu0 0.0
    %v562 = vand.u32 %v158, 4294901760
    %v563 = vsub.f32 %v158, %v562
    %v564 = vand.u32 %v563, 4294901760
    %565 = vmatmul.mubr.f32.gmra.mrb[0].mxu0 %v564
    %v566 = vpop.f32.mrb[0].mxu0
    %v567 = vadd.f32 %v468, %v566
    %v568 = vpop.f32.mrb[0].mxu0
    %569 = vmatprep.mubr.f32.mxu0 0.0
    %v570 = vand.u32 %v161, 4294901760
    %v571 = vsub.f32 %v161, %v570
    %v572 = vand.u32 %v571, 4294901760
    %573 = vmatmul.mubr.f32.gmra.mrb[0].mxu0 %v572
    %v574 = vpop.f32.mrb[0].mxu0
    %v575 = vadd.f32 %v475, %v574
    %v576 = vpop.f32.mrb[0].mxu0
    %577 = vmatprep.mubr.f32.mxu0 0.0
    %v578 = vand.u32 %v164, 4294901760
    %v579 = vsub.f32 %v164, %v578
    %v580 = vand.u32 %v579, 4294901760
    %581 = vmatmul.mubr.f32.gmra.mrb[0].mxu0 %v580
    %v582 = vpop.f32.mrb[0].mxu0
    %v583 = vadd.f32 %v482, %v582
    %v584 = vpop.f32.mrb[0].mxu0
    %585 = vdwg.mxu0
    %586 = vmatprep.subr.mxu0 0.0
    %v587 = vand.u32 %v129, 4294901760
    %v588 = vsub.f32 %v129, %v587
    %v589 = vand.u32 %v588, 4294901760
    %590 = vmatpush1.msra.mxu0 %v589
    %591 = vmatprep.subr.mxu0 0.0
    %v592 = vand.u32 %v130, 4294901760
    %v593 = vsub.f32 %v130, %v592
    %v594 = vand.u32 %v593, 4294901760
    %595 = vmatpush1.msra.mxu0 %v594
    %596 = vmatprep.subr.mxu0 0.0
    %v597 = vand.u32 %v131, 4294901760
    %v598 = vsub.f32 %v131, %v597
    %v599 = vand.u32 %v598, 4294901760
    %600 = vmatpush1.msra.mxu0 %v599
    %601 = vmatprep.subr.mxu0 0.0
    %v602 = vand.u32 %v132, 4294901760
    %v603 = vsub.f32 %v132, %v602
    %v604 = vand.u32 %v603, 4294901760
    %605 = vmatpush1.msra.mxu0 %v604
    %606 = vmatprep.subr.mxu0 0.0
    %607 = vmatpush1.msra.mxu0 0.0
    %608 = vmatprep.subr.mxu0 0.0
    %609 = vmatpush1.msra.mxu0 0.0
    %610 = vmatprep.subr.mxu0 0.0
    %611 = vmatpush1.msra.mxu0 0.0
    %612 = vmatprep.subr.mxu0 0.0
    %613 = vmatpush1.msra.mxu0 0.0
    %614 = vmatprep.subr.mxu0 0.0
    %615 = vmatpush1.msra.mxu0 0.0
    %616 = vmatprep.subr.mxu0 0.0
    %617 = vmatpush1.msra.mxu0 0.0
    %618 = vmatprep.subr.mxu0 0.0
    %619 = vmatpush1.msra.mxu0 0.0
    %620 = vmatprep.subr.mxu0 0.0
    %621 = vmatpush1.msra.mxu0 0.0
    %622 = vmatprep.subr.mxu0 0.0
    %623 = vmatpush1.msra.mxu0 0.0
    %624 = vmatprep.subr.mxu0 0.0
    %625 = vmatpush1.msra.mxu0 0.0
    %626 = vmatprep.subr.mxu0 0.0
    %627 = vmatpush1.msra.mxu0 0.0
    %628 = vmatprep.subr.mxu0 0.0
    %629 = vmatpush1.msra.mxu0 0.0
    %630 = vmatprep.subr.mxu0 0.0
    %631 = vmatpush1.msra.mxu0 0.0
    %632 = vmatprep.subr.mxu0 0.0
    %633 = vmatpush1.msra.mxu0 0.0
    %634 = vmatprep.subr.mxu0 0.0
    %635 = vmatpush1.msra.mxu0 0.0
    %636 = vmatprep.subr.mxu0 0.0
    %637 = vmatpush1.msra.mxu0 0.0
    %638 = vmatprep.subr.mxu0 0.0
    %639 = vmatpush1.msra.mxu0 0.0
    %640 = vmatprep.subr.mxu0 0.0
    %641 = vmatpush1.msra.mxu0 0.0
    %642 = vmatprep.subr.mxu0 0.0
    %643 = vmatpush1.msra.mxu0 0.0
    %644 = vmatprep.subr.mxu0 0.0
    %645 = vmatpush1.msra.mxu0 0.0
    %646 = vmatprep.subr.mxu0 0.0
    %647 = vmatpush1.msra.mxu0 0.0
    %648 = vmatprep.subr.mxu0 0.0
    %649 = vmatpush1.msra.mxu0 0.0
    %650 = vmatprep.subr.mxu0 0.0
    %651 = vmatpush1.msra.mxu0 0.0
    %652 = vmatprep.subr.mxu0 0.0
    %653 = vmatpush1.msra.mxu0 0.0
    %654 = vmatprep.subr.mxu0 0.0
    %655 = vmatpush1.msra.mxu0 0.0
    %656 = vmatprep.subr.mxu0 0.0
    %657 = vmatpush1.msra.mxu0 0.0
    %658 = vmatprep.subr.mxu0 0.0
    %659 = vmatpush1.msra.mxu0 0.0
    %660 = vmatprep.subr.mxu0 0.0
    %661 = vmatpush1.msra.mxu0 0.0
    %662 = vmatprep.mubr.f32.mxu0 0.0
    %v663 = vand.u32 %v155, 4294901760
    %664 = vmatmul.mubr.f32.gmra.mrb[0].mxu0 %v663
    %v665 = vpop.f32.mrb[0].mxu0
    %v666 = vadd.f32 %v559, %v665
    %v667 = vpop.f32.mrb[0].mxu0
    %668 = vmatprep.mubr.f32.mxu0 0.0
    %v669 = vand.u32 %v158, 4294901760
    %670 = vmatmul.mubr.f32.gmra.mrb[0].mxu0 %v669
    %v671 = vpop.f32.mrb[0].mxu0
    %v672 = vadd.f32 %v567, %v671
    %v673 = vpop.f32.mrb[0].mxu0
    %674 = vmatprep.mubr.f32.mxu0 0.0
    %v675 = vand.u32 %v161, 4294901760
    %676 = vmatmul.mubr.f32.gmra.mrb[0].mxu0 %v675
    %v677 = vpop.f32.mrb[0].mxu0
    %v678 = vadd.f32 %v575, %v677
    %v679 = vpop.f32.mrb[0].mxu0
    %680 = vmatprep.mubr.f32.mxu0 0.0
    %v681 = vand.u32 %v164, 4294901760
    %682 = vmatmul.mubr.f32.gmra.mrb[0].mxu0 %v681
    %v683 = vpop.f32.mrb[0].mxu0
    %v684 = vadd.f32 %v583, %v683
    %v685 = vpop.f32.mrb[0].mxu0
    %686 = vdwg.mxu0
    %687 = vmatprep.subr.mxu0 0.0
    %v688 = vand.u32 %v129, 4294901760
    %689 = vmatpush1.msra.mxu0 %v688
    %690 = vmatprep.subr.mxu0 0.0
    %v691 = vand.u32 %v130, 4294901760
    %692 = vmatpush1.msra.mxu0 %v691
    %693 = vmatprep.subr.mxu0 0.0
    %v694 = vand.u32 %v131, 4294901760
    %695 = vmatpush1.msra.mxu0 %v694
    %696 = vmatprep.subr.mxu0 0.0
    %v697 = vand.u32 %v132, 4294901760
    %698 = vmatpush1.msra.mxu0 %v697
    %699 = vmatprep.subr.mxu0 0.0
    %700 = vmatpush1.msra.mxu0 0.0
    %701 = vmatprep.subr.mxu0 0.0
    %702 = vmatpush1.msra.mxu0 0.0
    %703 = vmatprep.subr.mxu0 0.0
    %704 = vmatpush1.msra.mxu0 0.0
    %705 = vmatprep.subr.mxu0 0.0
    %706 = vmatpush1.msra.mxu0 0.0
    %707 = vmatprep.subr.mxu0 0.0
    %708 = vmatpush1.msra.mxu0 0.0
    %709 = vmatprep.subr.mxu0 0.0
    %710 = vmatpush1.msra.mxu0 0.0
    %711 = vmatprep.subr.mxu0 0.0
    %712 = vmatpush1.msra.mxu0 0.0
    %713 = vmatprep.subr.mxu0 0.0
    %714 = vmatpush1.msra.mxu0 0.0
    %715 = vmatprep.subr.mxu0 0.0
    %716 = vmatpush1.msra.mxu0 0.0
    %717 = vmatprep.subr.mxu0 0.0
    %718 = vmatpush1.msra.mxu0 0.0
    %719 = vmatprep.subr.mxu0 0.0
    %720 = vmatpush1.msra.mxu0 0.0
    %721 = vmatprep.subr.mxu0 0.0
    %722 = vmatpush1.msra.mxu0 0.0
    %723 = vmatprep.subr.mxu0 0.0
    %724 = vmatpush1.msra.mxu0 0.0
    %725 = vmatprep.subr.mxu0 0.0
    %726 = vmatpush1.msra.mxu0 0.0
    %727 = vmatprep.subr.mxu0 0.0
    %728 = vmatpush1.msra.mxu0 0.0
    %729 = vmatprep.subr.mxu0 0.0
    %730 = vmatpush1.msra.mxu0 0.0
    %731 = vmatprep.subr.mxu0 0.0
    %732 = vmatpush1.msra.mxu0 0.0
    %733 = vmatprep.subr.mxu0 0.0
    %734 = vmatpush1.msra.mxu0 0.0
    %735 = vmatprep.subr.mxu0 0.0
    %736 = vmatpush1.msra.mxu0 0.0
    %737 = vmatprep.subr.mxu0 0.0
    %738 = vmatpush1.msra.mxu0 0.0
    %739 = vmatprep.subr.mxu0 0.0
    %740 = vmatpush1.msra.mxu0 0.0
    %741 = vmatprep.subr.mxu0 0.0
    %742 = vmatpush1.msra.mxu0 0.0
    %743 = vmatprep.subr.mxu0 0.0
    %744 = vmatpush1.msra.mxu0 0.0
    %745 = vmatprep.subr.mxu0 0.0
    %746 = vmatpush1.msra.mxu0 0.0
    %747 = vmatprep.subr.mxu0 0.0
    %748 = vmatpush1.msra.mxu0 0.0
    %749 = vmatprep.subr.mxu0 0.0
    %750 = vmatpush1.msra.mxu0 0.0
    %751 = vmatprep.subr.mxu0 0.0
    %752 = vmatpush1.msra.mxu0 0.0
    %753 = vmatprep.subr.mxu0 0.0
    %754 = vmatpush1.msra.mxu0 0.0
    %755 = vmatprep.mubr.f32.mxu0 0.0
    %v756 = vand.u32 %v155, 4294901760
    %757 = vmatmul.mubr.f32.gmra.mrb[0].mxu0 %v756
    %v758 = vpop.f32.mrb[0].mxu0
    %v759 = vadd.f32 %v666, %v758
    %v760 = vpop.f32.mrb[0].mxu0
    %761 = vmatprep.mubr.f32.mxu0 0.0
    %v762 = vand.u32 %v158, 4294901760
    %763 = vmatmul.mubr.f32.gmra.mrb[0].mxu0 %v762
    %v764 = vpop.f32.mrb[0].mxu0
    %v765 = vadd.f32 %v672, %v764
    %v766 = vpop.f32.mrb[0].mxu0
    %767 = vmatprep.mubr.f32.mxu0 0.0
    %v768 = vand.u32 %v161, 4294901760
    %769 = vmatmul.mubr.f32.gmra.mrb[0].mxu0 %v768
    %v770 = vpop.f32.mrb[0].mxu0
    %v771 = vadd.f32 %v678, %v770
    %v772 = vpop.f32.mrb[0].mxu0
    %773 = vmatprep.mubr.f32.mxu0 0.0
    %v774 = vand.u32 %v164, 4294901760
    %775 = vmatmul.mubr.f32.gmra.mrb[0].mxu0 %v774
    %v776 = vpop.f32.mrb[0].mxu0
    %v777 = vadd.f32 %v684, %v776
    %v778 = vpop.f32.mrb[0].mxu0
    %779 = vdwg.mxu0
    %v780 = vtanh.pop %v759
    %v781 = vtanh.pop %v765
    %v782 = vtanh.pop %v771
    %v783 = vtanh.pop %v777
    %785 = vset.pattern.permute.xlu0 0
    %786 = vperm.xlu0 %785, %v47
    %v787 = vpop.permute.xlu0 %786
    %v790 = vsel %vm153, %v46, 0
    %792 = vmatprep.subr.mxu0 0.0
    %v793 = vand.u32 %v780, 4294901760
    %794 = vmatpush1.msra.mxu0 %v793
    %795 = vmatprep.subr.mxu0 0.0
    %v796 = vand.u32 %v781, 4294901760
    %797 = vmatpush1.msra.mxu0 %v796
    %798 = vmatprep.subr.mxu0 0.0
    %v799 = vand.u32 %v782, 4294901760
    %800 = vmatpush1.msra.mxu0 %v799
    %801 = vmatprep.subr.mxu0 0.0
    %v802 = vand.u32 %v783, 4294901760
    %803 = vmatpush1.msra.mxu0 %v802
    %804 = vmatprep.subr.mxu0 0.0
    %805 = vmatpush1.msra.mxu0 0.0
    %806 = vmatprep.subr.mxu0 0.0
    %807 = vmatpush1.msra.mxu0 0.0
    %808 = vmatprep.subr.mxu0 0.0
    %809 = vmatpush1.msra.mxu0 0.0
    %810 = vmatprep.subr.mxu0 0.0
    %811 = vmatpush1.msra.mxu0 0.0
    %812 = vmatprep.subr.mxu0 0.0
    %813 = vmatpush1.msra.mxu0 0.0
    %814 = vmatprep.subr.mxu0 0.0
    %815 = vmatpush1.msra.mxu0 0.0
    %816 = vmatprep.subr.mxu0 0.0
    %817 = vmatpush1.msra.mxu0 0.0
    %818 = vmatprep.subr.mxu0 0.0
    %819 = vmatpush1.msra.mxu0 0.0
    %820 = vmatprep.subr.mxu0 0.0
    %821 = vmatpush1.msra.mxu0 0.0
    %822 = vmatprep.subr.mxu0 0.0
    %823 = vmatpush1.msra.mxu0 0.0
    %824 = vmatprep.subr.mxu0 0.0
    %825 = vmatpush1.msra.mxu0 0.0
    %826 = vmatprep.subr.mxu0 0.0
    %827 = vmatpush1.msra.mxu0 0.0
    %828 = vmatprep.subr.mxu0 0.0
    %829 = vmatpush1.msra.mxu0 0.0
    %830 = vmatprep.subr.mxu0 0.0
    %831 = vmatpush1.msra.mxu0 0.0
    %832 = vmatprep.subr.mxu0 0.0
    %833 = vmatpush1.msra.mxu0 0.0
    %834 = vmatprep.subr.mxu0 0.0
    %835 = vmatpush1.msra.mxu0 0.0
    %836 = vmatprep.subr.mxu0 0.0
    %837 = vmatpush1.msra.mxu0 0.0
    %838 = vmatprep.subr.mxu0 0.0
    %839 = vmatpush1.msra.mxu0 0.0
    %840 = vmatprep.subr.mxu0 0.0
    %841 = vmatpush1.msra.mxu0 0.0
    %842 = vmatprep.subr.mxu0 0.0
    %843 = vmatpush1.msra.mxu0 0.0
    %844 = vmatprep.subr.mxu0 0.0
    %845 = vmatpush1.msra.mxu0 0.0
    %846 = vmatprep.subr.mxu0 0.0
    %847 = vmatpush1.msra.mxu0 0.0
    %848 = vmatprep.subr.mxu0 0.0
    %849 = vmatpush1.msra.mxu0 0.0
    %850 = vmatprep.subr.mxu0 0.0
    %851 = vmatpush1.msra.mxu0 0.0
    %852 = vmatprep.subr.mxu0 0.0
    %853 = vmatpush1.msra.mxu0 0.0
    %854 = vmatprep.subr.mxu0 0.0
    %855 = vmatpush1.msra.mxu0 0.0
    %856 = vmatprep.subr.mxu0 0.0
    %857 = vmatpush1.msra.mxu0 0.0
    %858 = vmatprep.subr.mxu0 0.0
    %859 = vmatpush1.msra.mxu0 0.0
    %860 = vmatprep.mubr.f32.mxu0 0.0
    %v861 = vand.u32 %v790, 4294901760
    %v862 = vsub.f32 %v790, %v861
    %v863 = vand.u32 %v862, 4294901760
    %v864 = vsub.f32 %v862, %v863
    %v865 = vand.u32 %v864, 4294901760
    %866 = vmatmul.mubr.f32.gmra.mrb[0].mxu0 %v865
    %v867 = vpop.f32.mrb[0].mxu0
    %v868 = vadd.f32 %v787, %v867
    %v869 = vpop.f32.mrb[0].mxu0
    %870 = vdwg.mxu0
    %871 = vmatprep.subr.mxu0 0.0
    %v872 = vand.u32 %v780, 4294901760
    %v873 = vsub.f32 %v780, %v872
    %v874 = vand.u32 %v873, 4294901760
    %v875 = vsub.f32 %v873, %v874
    %v876 = vand.u32 %v875, 4294901760
    %877 = vmatpush1.msra.mxu0 %v876
    %878 = vmatprep.subr.mxu0 0.0
    %v879 = vand.u32 %v781, 4294901760
    %v880 = vsub.f32 %v781, %v879
    %v881 = vand.u32 %v880, 4294901760
    %v882 = vsub.f32 %v880, %v881
    %v883 = vand.u32 %v882, 4294901760
    %884 = vmatpush1.msra.mxu0 %v883
    %885 = vmatprep.subr.mxu0 0.0
    %v886 = vand.u32 %v782, 4294901760
    %v887 = vsub.f32 %v782, %v886
    %v888 = vand.u32 %v887, 4294901760
    %v889 = vsub.f32 %v887, %v888
    %v890 = vand.u32 %v889, 4294901760
    %891 = vmatpush1.msra.mxu0 %v890
    %892 = vmatprep.subr.mxu0 0.0
    %v893 = vand.u32 %v783, 4294901760
    %v894 = vsub.f32 %v783, %v893
    %v895 = vand.u32 %v894, 4294901760
    %v896 = vsub.f32 %v894, %v895
    %v897 = vand.u32 %v896, 4294901760
    %898 = vmatpush1.msra.mxu0 %v897
    %899 = vmatprep.subr.mxu0 0.0
    %900 = vmatpush1.msra.mxu0 0.0
    %901 = vmatprep.subr.mxu0 0.0
    %902 = vmatpush1.msra.mxu0 0.0
    %903 = vmatprep.subr.mxu0 0.0
    %904 = vmatpush1.msra.mxu0 0.0
    %905 = vmatprep.subr.mxu0 0.0
    %906 = vmatpush1.msra.mxu0 0.0
    %907 = vmatprep.subr.mxu0 0.0
    %908 = vmatpush1.msra.mxu0 0.0
    %909 = vmatprep.subr.mxu0 0.0
    %910 = vmatpush1.msra.mxu0 0.0
    %911 = vmatprep.subr.mxu0 0.0
    %912 = vmatpush1.msra.mxu0 0.0
    %913 = vmatprep.subr.mxu0 0.0
    %914 = vmatpush1.msra.mxu0 0.0
    %915 = vmatprep.subr.mxu0 0.0
    %916 = vmatpush1.msra.mxu0 0.0
    %917 = vmatprep.subr.mxu0 0.0
    %918 = vmatpush1.msra.mxu0 0.0
    %919 = vmatprep.subr.mxu0 0.0
    %920 = vmatpush1.msra.mxu0 0.0
    %921 = vmatprep.subr.mxu0 0.0
    %922 = vmatpush1.msra.mxu0 0.0
    %923 = vmatprep.subr.mxu0 0.0
    %924 = vmatpush1.msra.mxu0 0.0
    %925 = vmatprep.subr.mxu0 0.0
    %926 = vmatpush1.msra.mxu0 0.0
    %927 = vmatprep.subr.mxu0 0.0
    %928 = vmatpush1.msra.mxu0 0.0
    %929 = vmatprep.subr.mxu0 0.0
    %930 = vmatpush1.msra.mxu0 0.0
    %931 = vmatprep.subr.mxu0 0.0
    %932 = vmatpush1.msra.mxu0 0.0
    %933 = vmatprep.subr.mxu0 0.0
    %934 = vmatpush1.msra.mxu0 0.0
    %935 = vmatprep.subr.mxu0 0.0
    %936 = vmatpush1.msra.mxu0 0.0
    %937 = vmatprep.subr.mxu0 0.0
    %938 = vmatpush1.msra.mxu0 0.0
    %939 = vmatprep.subr.mxu0 0.0
    %940 = vmatpush1.msra.mxu0 0.0
    %941 = vmatprep.subr.mxu0 0.0
    %942 = vmatpush1.msra.mxu0 0.0
    %943 = vmatprep.subr.mxu0 0.0
    %944 = vmatpush1.msra.mxu0 0.0
    %945 = vmatprep.subr.mxu0 0.0
    %946 = vmatpush1.msra.mxu0 0.0
    %947 = vmatprep.subr.mxu0 0.0
    %948 = vmatpush1.msra.mxu0 0.0
    %949 = vmatprep.subr.mxu0 0.0
    %950 = vmatpush1.msra.mxu0 0.0
    %951 = vmatprep.subr.mxu0 0.0
    %952 = vmatpush1.msra.mxu0 0.0
    %953 = vmatprep.subr.mxu0 0.0
    %954 = vmatpush1.msra.mxu0 0.0
    %955 = vmatprep.mubr.f32.mxu0 0.0
    %v956 = vand.u32 %v790, 4294901760
    %957 = vmatmul.mubr.f32.gmra.mrb[0].mxu0 %v956
    %v958 = vpop.f32.mrb[0].mxu0
    %v959 = vadd.f32 %v868, %v958
    %v960 = vpop.f32.mrb[0].mxu0
    %961 = vdwg.mxu0
    %962 = vmatprep.subr.mxu0 0.0
    %v963 = vand.u32 %v780, 4294901760
    %v964 = vsub.f32 %v780, %v963
    %965 = vmatpush1.msra.mxu0 %v964
    %966 = vmatprep.subr.mxu0 0.0
    %v967 = vand.u32 %v781, 4294901760
    %v968 = vsub.f32 %v781, %v967
    %969 = vmatpush1.msra.mxu0 %v968
    %970 = vmatprep.subr.mxu0 0.0
    %v971 = vand.u32 %v782, 4294901760
    %v972 = vsub.f32 %v782, %v971
    %973 = vmatpush1.msra.mxu0 %v972
    %974 = vmatprep.subr.mxu0 0.0
    %v975 = vand.u32 %v783, 4294901760
    %v976 = vsub.f32 %v783, %v975
    %977 = vmatpush1.msra.mxu0 %v976
    %978 = vmatprep.subr.mxu0 0.0
    %979 = vmatpush1.msra.mxu0 0.0
    %980 = vmatprep.subr.mxu0 0.0
    %981 = vmatpush1.msra.mxu0 0.0
    %982 = vmatprep.subr.mxu0 0.0
    %983 = vmatpush1.msra.mxu0 0.0
    %984 = vmatprep.subr.mxu0 0.0
    %985 = vmatpush1.msra.mxu0 0.0
    %986 = vmatprep.subr.mxu0 0.0
    %987 = vmatpush1.msra.mxu0 0.0
    %988 = vmatprep.subr.mxu0 0.0
    %989 = vmatpush1.msra.mxu0 0.0
    %990 = vmatprep.subr.mxu0 0.0
    %991 = vmatpush1.msra.mxu0 0.0
    %992 = vmatprep.subr.mxu0 0.0
    %993 = vmatpush1.msra.mxu0 0.0
    %994 = vmatprep.subr.mxu0 0.0
    %995 = vmatpush1.msra.mxu0 0.0
    %996 = vmatprep.subr.mxu0 0.0
    %997 = vmatpush1.msra.mxu0 0.0
    %998 = vmatprep.subr.mxu0 0.0
    %999 = vmatpush1.msra.mxu0 0.0
    %1000 = vmatprep.subr.mxu0 0.0
    %1001 = vmatpush1.msra.mxu0 0.0
    %1002 = vmatprep.subr.mxu0 0.0
    %1003 = vmatpush1.msra.mxu0 0.0
    %1004 = vmatprep.subr.mxu0 0.0
    %1005 = vmatpush1.msra.mxu0 0.0
    %1006 = vmatprep.subr.mxu0 0.0
    %1007 = vmatpush1.msra.mxu0 0.0
    %1008 = vmatprep.subr.mxu0 0.0
    %1009 = vmatpush1.msra.mxu0 0.0
    %1010 = vmatprep.subr.mxu0 0.0
    %1011 = vmatpush1.msra.mxu0 0.0
    %1012 = vmatprep.subr.mxu0 0.0
    %1013 = vmatpush1.msra.mxu0 0.0
    %1014 = vmatprep.subr.mxu0 0.0
    %1015 = vmatpush1.msra.mxu0 0.0
    %1016 = vmatprep.subr.mxu0 0.0
    %1017 = vmatpush1.msra.mxu0 0.0
    %1018 = vmatprep.subr.mxu0 0.0
    %1019 = vmatpush1.msra.mxu0 0.0
    %1020 = vmatprep.subr.mxu0 0.0
    %1021 = vmatpush1.msra.mxu0 0.0
    %1022 = vmatprep.subr.mxu0 0.0
    %1023 = vmatpush1.msra.mxu0 0.0
    %1024 = vmatprep.subr.mxu0 0.0
    %1025 = vmatpush1.msra.mxu0 0.0
    %1026 = vmatprep.subr.mxu0 0.0
    %1027 = vmatpush1.msra.mxu0 0.0
    %1028 = vmatprep.subr.mxu0 0.0
    %1029 = vmatpush1.msra.mxu0 0.0
    %1030 = vmatprep.subr.mxu0 0.0
    %1031 = vmatpush1.msra.mxu0 0.0
    %1032 = vmatprep.subr.mxu0 0.0
    %1033 = vmatpush1.msra.mxu0 0.0
    %1034 = vmatprep.mubr.f32.mxu0 0.0
    %v1035 = vand.u32 %v790, 4294901760
    %v1036 = vsub.f32 %v790, %v1035
    %1037 = vmatmul.mubr.f32.gmra.mrb[0].mxu0 %v1036
    %v1038 = vpop.f32.mrb[0].mxu0
    %v1039 = vadd.f32 %v959, %v1038
    %v1040 = vpop.f32.mrb[0].mxu0
    %1041 = vdwg.mxu0
    %1042 = vmatprep.subr.mxu0 0.0
    %v1043 = vand.u32 %v780, 4294901760
    %1044 = vmatpush1.msra.mxu0 %v1043
    %1045 = vmatprep.subr.mxu0 0.0
    %v1046 = vand.u32 %v781, 4294901760
    %1047 = vmatpush1.msra.mxu0 %v1046
    %1048 = vmatprep.subr.mxu0 0.0
    %v1049 = vand.u32 %v782, 4294901760
    %1050 = vmatpush1.msra.mxu0 %v1049
    %1051 = vmatprep.subr.mxu0 0.0
    %v1052 = vand.u32 %v783, 4294901760
    %1053 = vmatpush1.msra.mxu0 %v1052
    %1054 = vmatprep.subr.mxu0 0.0
    %1055 = vmatpush1.msra.mxu0 0.0
    %1056 = vmatprep.subr.mxu0 0.0
    %1057 = vmatpush1.msra.mxu0 0.0
    %1058 = vmatprep.subr.mxu0 0.0
    %1059 = vmatpush1.msra.mxu0 0.0
    %1060 = vmatprep.subr.mxu0 0.0
    %1061 = vmatpush1.msra.mxu0 0.0
    %1062 = vmatprep.subr.mxu0 0.0
    %1063 = vmatpush1.msra.mxu0 0.0
    %1064 = vmatprep.subr.mxu0 0.0
    %1065 = vmatpush1.msra.mxu0 0.0
    %1066 = vmatprep.subr.mxu0 0.0
    %1067 = vmatpush1.msra.mxu0 0.0
    %1068 = vmatprep.subr.mxu0 0.0
    %1069 = vmatpush1.msra.mxu0 0.0
    %1070 = vmatprep.subr.mxu0 0.0
    %1071 = vmatpush1.msra.mxu0 0.0
    %1072 = vmatprep.subr.mxu0 0.0
    %1073 = vmatpush1.msra.mxu0 0.0
    %1074 = vmatprep.subr.mxu0 0.0
    %1075 = vmatpush1.msra.mxu0 0.0
    %1076 = vmatprep.subr.mxu0 0.0
    %1077 = vmatpush1.msra.mxu0 0.0
    %1078 = vmatprep.subr.mxu0 0.0
    %1079 = vmatpush1.msra.mxu0 0.0
    %1080 = vmatprep.subr.mxu0 0.0
    %1081 = vmatpush1.msra.mxu0 0.0
    %1082 = vmatprep.subr.mxu0 0.0
    %1083 = vmatpush1.msra.mxu0 0.0
    %1084 = vmatprep.subr.mxu0 0.0
    %1085 = vmatpush1.msra.mxu0 0.0
    %1086 = vmatprep.subr.mxu0 0.0
    %1087 = vmatpush1.msra.mxu0 0.0
    %1088 = vmatprep.subr.mxu0 0.0
    %1089 = vmatpush1.msra.mxu0 0.0
    %1090 = vmatprep.subr.mxu0 0.0
    %1091 = vmatpush1.msra.mxu0 0.0
    %1092 = vmatprep.subr.mxu0 0.0
    %1093 = vmatpush1.msra.mxu0 0.0
    %1094 = vmatprep.subr.mxu0 0.0
    %1095 = vmatpush1.msra.mxu0 0.0
    %1096 = vmatprep.subr.mxu0 0.0
    %1097 = vmatpush1.msra.mxu0 0.0
    %1098 = vmatprep.subr.mxu0 0.0
    %1099 = vmatpush1.msra.mxu0 0.0
    %1100 = vmatprep.subr.mxu0 0.0
    %1101 = vmatpush1.msra.mxu0 0.0
    %1102 = vmatprep.subr.mxu0 0.0
    %1103 = vmatpush1.msra.mxu0 0.0
    %1104 = vmatprep.subr.mxu0 0.0
    %1105 = vmatpush1.msra.mxu0 0.0
    %1106 = vmatprep.subr.mxu0 0.0
    %1107 = vmatpush1.msra.mxu0 0.0
    %1108 = vmatprep.subr.mxu0 0.0
    %1109 = vmatpush1.msra.mxu0 0.0
    %1110 = vmatprep.mubr.f32.mxu0 0.0
    %v1111 = vand.u32 %v790, 4294901760
    %v1112 = vsub.f32 %v790, %v1111
    %v1113 = vand.u32 %v1112, 4294901760
    %1114 = vmatmul.mubr.f32.gmra.mrb[0].mxu0 %v1113
    %v1115 = vpop.f32.mrb[0].mxu0
    %v1116 = vadd.f32 %v1039, %v1115
    %v1117 = vpop.f32.mrb[0].mxu0
    %1118 = vdwg.mxu0
    %1119 = vmatprep.subr.mxu0 0.0
    %v1120 = vand.u32 %v780, 4294901760
    %v1121 = vsub.f32 %v780, %v1120
    %v1122 = vand.u32 %v1121, 4294901760
    %1123 = vmatpush1.msra.mxu0 %v1122
    %1124 = vmatprep.subr.mxu0 0.0
    %v1125 = vand.u32 %v781, 4294901760
    %v1126 = vsub.f32 %v781, %v1125
    %v1127 = vand.u32 %v1126, 4294901760
    %1128 = vmatpush1.msra.mxu0 %v1127
    %1129 = vmatprep.subr.mxu0 0.0
    %v1130 = vand.u32 %v782, 4294901760
    %v1131 = vsub.f32 %v782, %v1130
    %v1132 = vand.u32 %v1131, 4294901760
    %1133 = vmatpush1.msra.mxu0 %v1132
    %1134 = vmatprep.subr.mxu0 0.0
    %v1135 = vand.u32 %v783, 4294901760
    %v1136 = vsub.f32 %v783, %v1135
    %v1137 = vand.u32 %v1136, 4294901760
    %1138 = vmatpush1.msra.mxu0 %v1137
    %1139 = vmatprep.subr.mxu0 0.0
    %1140 = vmatpush1.msra.mxu0 0.0
    %1141 = vmatprep.subr.mxu0 0.0
    %1142 = vmatpush1.msra.mxu0 0.0
    %1143 = vmatprep.subr.mxu0 0.0
    %1144 = vmatpush1.msra.mxu0 0.0
    %1145 = vmatprep.subr.mxu0 0.0
    %1146 = vmatpush1.msra.mxu0 0.0
    %1147 = vmatprep.subr.mxu0 0.0
    %1148 = vmatpush1.msra.mxu0 0.0
    %1149 = vmatprep.subr.mxu0 0.0
    %1150 = vmatpush1.msra.mxu0 0.0
    %1151 = vmatprep.subr.mxu0 0.0
    %1152 = vmatpush1.msra.mxu0 0.0
    %1153 = vmatprep.subr.mxu0 0.0
    %1154 = vmatpush1.msra.mxu0 0.0
    %1155 = vmatprep.subr.mxu0 0.0
    %1156 = vmatpush1.msra.mxu0 0.0
    %1157 = vmatprep.subr.mxu0 0.0
    %1158 = vmatpush1.msra.mxu0 0.0
    %1159 = vmatprep.subr.mxu0 0.0
    %1160 = vmatpush1.msra.mxu0 0.0
    %1161 = vmatprep.subr.mxu0 0.0
    %1162 = vmatpush1.msra.mxu0 0.0
    %1163 = vmatprep.subr.mxu0 0.0
    %1164 = vmatpush1.msra.mxu0 0.0
    %1165 = vmatprep.subr.mxu0 0.0
    %1166 = vmatpush1.msra.mxu0 0.0
    %1167 = vmatprep.subr.mxu0 0.0
    %1168 = vmatpush1.msra.mxu0 0.0
    %1169 = vmatprep.subr.mxu0 0.0
    %1170 = vmatpush1.msra.mxu0 0.0
    %1171 = vmatprep.subr.mxu0 0.0
    %1172 = vmatpush1.msra.mxu0 0.0
    %1173 = vmatprep.subr.mxu0 0.0
    %1174 = vmatpush1.msra.mxu0 0.0
    %1175 = vmatprep.subr.mxu0 0.0
    %1176 = vmatpush1.msra.mxu0 0.0
    %1177 = vmatprep.subr.mxu0 0.0
    %1178 = vmatpush1.msra.mxu0 0.0
    %1179 = vmatprep.subr.mxu0 0.0
    %1180 = vmatpush1.msra.mxu0 0.0
    %1181 = vmatprep.subr.mxu0 0.0
    %1182 = vmatpush1.msra.mxu0 0.0
    %1183 = vmatprep.subr.mxu0 0.0
    %1184 = vmatpush1.msra.mxu0 0.0
    %1185 = vmatprep.subr.mxu0 0.0
    %1186 = vmatpush1.msra.mxu0 0.0
    %1187 = vmatprep.subr.mxu0 0.0
    %1188 = vmatpush1.msra.mxu0 0.0
    %1189 = vmatprep.subr.mxu0 0.0
    %1190 = vmatpush1.msra.mxu0 0.0
    %1191 = vmatprep.subr.mxu0 0.0
    %1192 = vmatpush1.msra.mxu0 0.0
    %1193 = vmatprep.subr.mxu0 0.0
    %1194 = vmatpush1.msra.mxu0 0.0
    %1195 = vmatprep.mubr.f32.mxu0 0.0
    %v1196 = vand.u32 %v790, 4294901760
    %1197 = vmatmul.mubr.f32.gmra.mrb[0].mxu0 %v1196
    %v1198 = vpop.f32.mrb[0].mxu0
    %v1199 = vadd.f32 %v1116, %v1198
    %v1200 = vpop.f32.mrb[0].mxu0
    %1201 = vdwg.mxu0
    %1202 = vmatprep.subr.mxu0 0.0
    %v1203 = vand.u32 %v780, 4294901760
    %1204 = vmatpush1.msra.mxu0 %v1203
    %1205 = vmatprep.subr.mxu0 0.0
    %v1206 = vand.u32 %v781, 4294901760
    %1207 = vmatpush1.msra.mxu0 %v1206
    %1208 = vmatprep.subr.mxu0 0.0
    %v1209 = vand.u32 %v782, 4294901760
    %1210 = vmatpush1.msra.mxu0 %v1209
    %1211 = vmatprep.subr.mxu0 0.0
    %v1212 = vand.u32 %v783, 4294901760
    %1213 = vmatpush1.msra.mxu0 %v1212
    %1214 = vmatprep.subr.mxu0 0.0
    %1215 = vmatpush1.msra.mxu0 0.0
    %1216 = vmatprep.subr.mxu0 0.0
    %1217 = vmatpush1.msra.mxu0 0.0
    %1218 = vmatprep.subr.mxu0 0.0
    %1219 = vmatpush1.msra.mxu0 0.0
    %1220 = vmatprep.subr.mxu0 0.0
    %1221 = vmatpush1.msra.mxu0 0.0
    %1222 = vmatprep.subr.mxu0 0.0
    %1223 = vmatpush1.msra.mxu0 0.0
    %1224 = vmatprep.subr.mxu0 0.0
    %1225 = vmatpush1.msra.mxu0 0.0
    %1226 = vmatprep.subr.mxu0 0.0
    %1227 = vmatpush1.msra.mxu0 0.0
    %1228 = vmatprep.subr.mxu0 0.0
    %1229 = vmatpush1.msra.mxu0 0.0
    %1230 = vmatprep.subr.mxu0 0.0
    %1231 = vmatpush1.msra.mxu0 0.0
    %1232 = vmatprep.subr.mxu0 0.0
    %1233 = vmatpush1.msra.mxu0 0.0
    %1234 = vmatprep.subr.mxu0 0.0
    %1235 = vmatpush1.msra.mxu0 0.0
    %1236 = vmatprep.subr.mxu0 0.0
    %1237 = vmatpush1.msra.mxu0 0.0
    %1238 = vmatprep.subr.mxu0 0.0
    %1239 = vmatpush1.msra.mxu0 0.0
    %1240 = vmatprep.subr.mxu0 0.0
    %1241 = vmatpush1.msra.mxu0 0.0
    %1242 = vmatprep.subr.mxu0 0.0
    %1243 = vmatpush1.msra.mxu0 0.0
    %1244 = vmatprep.subr.mxu0 0.0
    %1245 = vmatpush1.msra.mxu0 0.0
    %1246 = vmatprep.subr.mxu0 0.0
    %1247 = vmatpush1.msra.mxu0 0.0
    %1248 = vmatprep.subr.mxu0 0.0
    %1249 = vmatpush1.msra.mxu0 0.0
    %1250 = vmatprep.subr.mxu0 0.0
    %1251 = vmatpush1.msra.mxu0 0.0
    %1252 = vmatprep.subr.mxu0 0.0
    %1253 = vmatpush1.msra.mxu0 0.0
    %1254 = vmatprep.subr.mxu0 0.0
    %1255 = vmatpush1.msra.mxu0 0.0
    %1256 = vmatprep.subr.mxu0 0.0
    %1257 = vmatpush1.msra.mxu0 0.0
    %1258 = vmatprep.subr.mxu0 0.0
    %1259 = vmatpush1.msra.mxu0 0.0
    %1260 = vmatprep.subr.mxu0 0.0
    %1261 = vmatpush1.msra.mxu0 0.0
    %1262 = vmatprep.subr.mxu0 0.0
    %1263 = vmatpush1.msra.mxu0 0.0
    %1264 = vmatprep.subr.mxu0 0.0
    %1265 = vmatpush1.msra.mxu0 0.0
    %1266 = vmatprep.subr.mxu0 0.0
    %1267 = vmatpush1.msra.mxu0 0.0
    %1268 = vmatprep.subr.mxu0 0.0
    %1269 = vmatpush1.msra.mxu0 0.0
    %1270 = vmatprep.mubr.f32.mxu0 0.0
    %v1271 = vand.u32 %v790, 4294901760
    %1272 = vmatmul.mubr.f32.gmra.mrb[0].mxu0 %v1271
    %v1273 = vpop.f32.mrb[0].mxu0
    %v1274 = vadd.f32 %v1199, %v1273
    %v1275 = vpop.f32.mrb[0].mxu0
    %1276 = vdwg.mxu0
    %1277 = vst [vmem:[#allocation2] sm:$0x1] %v1274
    %1278 = vst [vmem:[#allocation4 - $0x1] sm:$0x2] %v1274
    // Predicated region
    $region30: #{tpu_custom_call.1} parent=1 // pred_check
      _
    $region31: #{tpu_custom_call.1} parent=1 // pred_check_branch
      %1280 = sbr.rel (0) target = $region33
    $region32: #{tpu_custom_call.1} parent=1 // pred_region
      %s1282 = ssub.s32 16, 16
      %1283 = vsyncadd [#allocation3], %s1282
      %s1285 = sshll.u32 [#allocation2], 4
      %s1286 = int_to_ptr.vmem [resolvable:$true] %s1285
      %1288 = dma.vmem_to_hbm [thread:$0]  %s1286, 16, %s7, [#allocation3]
    $region33: #{tpu_custom_call.1} parent=1 // pred_fallthru
      _
    // Predicated region
    $region34: #{tpu_custom_call.1} parent=1 // pred_check
      _
    $region35: #{tpu_custom_call.1} parent=1 // pred_check_branch
      %1290 = sbr.rel (0) target = $region37
    $region36: #{tpu_custom_call.1} parent=1 // pred_region
      %s1292 = ssub.s32 16, 16
      %1293 = vsyncadd [#allocation5], %s1292
      %s1295 = sshll.u32 [#allocation4], 4
      %s1296 = int_to_ptr.vmem [resolvable:$true] %s1295
      %1298 = dma.vmem_to_hbm [thread:$0]  %s1296, 16, %s8, [#allocation5]
    $region37: #{tpu_custom_call.1} parent=1 // pred_fallthru
      _
    // Predicated region
    $region38: #{tpu_custom_call.1} parent=1 // pred_check
      _
    $region39: #{tpu_custom_call.1} parent=1 // pred_check_branch
      %1300 = sbr.rel (0) target = $region41
    $region40: #{tpu_custom_call.1} parent=1 // pred_region
      %1301 = dma.done [#allocation3], 16
    $region41: #{tpu_custom_call.1} parent=1 // pred_fallthru
      _
    // Predicated region
    $region42: #{tpu_custom_call.1} parent=1 // pred_check
      _
    $region43: #{tpu_custom_call.1} parent=1 // pred_check_branch
      %1303 = sbr.rel (0) target = $region45
    $region44: #{tpu_custom_call.1} parent=1 // pred_region
      %1304 = dma.done [#allocation5], 16
    $region45: #{tpu_custom_call.1} parent=1 // pred_fallthru
      _
    %1305 = vsyncpa [#allocation3], 1
    %1306 = vsyncpa [#allocation5], 1

</llo_original>
